<compile_context>
chip_gen: v6e
topology: v6e:2x2x1
jax: 0.10.0
libtpu: 0.0.40
codegen_flags: <defaults>
</compile_context>

<pallas_src>
import functools

import jax
import jax.numpy as jnp
from jax import lax
from jax.experimental import pallas as pl
from jax.experimental.pallas import tpu as pltpu


def pointer_net_kernel(q_ref, se_ref, out_ref, *, T, S, approx_reciprocal):
    # q_ref  : (Bb, T, E)   attention queries, already projected by the Linear
    # se_ref : (Bb, S, E)   source encodings
    # out_ref: (Bb, 1, T*S) flattened (lane-dense) softmax pointer weights
    q = q_ref[...]
    se = se_ref[...]

    # scores[b, t, s] = sum_e q[b, t, e] * se[b, s, e]
    # Batched contraction over the shared last dim: one dot_general per batch
    # block, no in-kernel transposes, f32 accumulation on the MXU.
    scores = jnp.einsum("bte,bse->bts", q, se,
                        preferred_element_type=jnp.float32)

    # Numerically stable softmax over the source axis, computed in f32.
    m = jnp.max(scores, axis=-1, keepdims=True)
    e = jnp.exp(scores - m)
    denom = jnp.sum(e, axis=-1, keepdims=True)
    if approx_reciprocal:
        # Pushes the divide onto the otherwise-idle EUP slot (approx vrcp);
        # slightly looser numerics than exact division.
        probs = e * pl.reciprocal(denom, approx=True)
    else:
        probs = e / denom
    probs = probs.astype(out_ref.dtype)

    # Lane-dense store: pack the (T, S) tile of every batch row into one
    # contiguous T*S-wide lane row (T*S is a multiple of 128 for the target
    # shapes), so the HBM-facing output block is dense instead of a
    # (T, S<128) block that needs masked partial stores + a strided DMA.
    for t in range(T):  # static unroll; T is small
        out_ref[:, :, t * S:(t + 1) * S] = probs[:, t:t + 1, :]


def pointer_net_forward(source_encodings, attention_vector_lin, weight, *,
                        batch_block=None, compute_dtype=None,
                        approx_reciprocal=False):
    """source_encodings: (B, S, E); attention_vector_lin: (T, B, A);
    weight: (A, E) (PyTorch nn.Linear convention, y = x @ W.T).
    Returns softmax pointer weights of shape (T, B, S)."""
    B, S, E = source_encodings.shape
    T, B2, A = attention_vector_lin.shape
    assert B == B2 and weight.shape == (A, E)

    # Hoist the Linear out of the Pallas kernel as ONE large GEMM,
    # re-associated:  q[b, t, :] = attention_vector_lin[t, b, :] @ W.
    # This also folds the (T, B, A) -> (B, T, E) permute into the GEMM's
    # output layout (no separate transpose pass over HBM).
    q = jnp.einsum("tba,ae->bte", attention_vector_lin, weight,
                   precision=lax.Precision.HIGHEST)

    if compute_dtype is not None:  # e.g. jnp.bfloat16 on v6e / v7x
        q = q.astype(compute_dtype)
        se = source_encodings.astype(compute_dtype)
    else:
        se = source_encodings

    if batch_block is None:
        if B == 1:
            batch_block = 1
        else:
            # Largest divisor of B that is <= min(8, B // 2): batches rows per
            # grid step (amortizes per-step pipeline overhead) while keeping
            # >= 2 parallel blocks so both v7x TensorCores get work.
            limit = min(8, B // 2)
            batch_block = max(d for d in range(1, limit + 1) if B % d == 0)
    assert B % batch_block == 0, "batch_block must divide the batch size"
    n_blocks = B // batch_block

    kernel = functools.partial(pointer_net_kernel, T=T, S=S,
                               approx_reciprocal=approx_reciprocal)

    # Output is (B, 1, T*S): the unit middle dim keeps the batch axis out of
    # the (8, 128)-constrained minor block dims, so batch_block is
    # unconstrained while the last dim stays a lane-dense multiple of 128.
    out_flat = pl.pallas_call(
        kernel,
        out_shape=jax.ShapeDtypeStruct((B, 1, T * S), jnp.float32),
        grid=(n_blocks,),
        in_specs=[
            pl.BlockSpec((batch_block, T, E), lambda b: (b, 0, 0)),
            pl.BlockSpec((batch_block, S, E), lambda b: (b, 0, 0)),
        ],
        out_specs=pl.BlockSpec((batch_block, 1, T * S), lambda b: (b, 0, 0)),
        compiler_params=pltpu.CompilerParams(
            dimension_semantics=("parallel",)),
    )(q, se)

    # (B, 1, T*S) -> (B, T, S) -> (T, B, S): reshape is free; the final
    # transpose reproduces the module's output layout.
    return jnp.transpose(out_flat.reshape(B, T, S), (1, 0, 2))


def pointer_net_reference(source_encodings, attention_vector_lin, weight):
    proj = jnp.einsum("bse,ae->bsa", source_encodings, weight,
                      precision=lax.Precision.HIGHEST)
    scores = jnp.einsum("bsa,tba->bts", proj, attention_vector_lin,
                        precision=lax.Precision.HIGHEST)
    scores = jnp.transpose(scores, (1, 0, 2))  # (T, B, S)
    return jax.nn.softmax(scores, axis=-1)


if __name__ == "__main__":
    # Small shapes consistent with the module's forward.
    B, S, T = 2, 16, 8          # batch, source length, target length
    E, A = 32, 32               # source_encoding_size, attention_vector_lin_size

    key = jax.random.PRNGKey(0)
    k1, k2, k3 = jax.random.split(key, 3)

    source_encodings = jax.random.normal(k1, (B, S, E), dtype=jnp.float32)
    attention_vector_lin = jax.random.normal(k2, (T, B, A), dtype=jnp.float32)
    # Deterministic init for nn.Linear(E, A, bias=False) weight of shape (A, E)
    # (uniform(-1/sqrt(E), 1/sqrt(E)) like the PyTorch default).
    bound = 1.0 / jnp.sqrt(jnp.float32(E))
    weight = jax.random.uniform(k3, (A, E), minval=-bound, maxval=bound,
                                dtype=jnp.float32)

    out = pointer_net_forward(source_encodings, attention_vector_lin, weight)
    out = jax.block_until_ready(out)

    ref = pointer_net_reference(source_encodings, attention_vector_lin, weight)
    assert out.shape == (T, B, S)
    assert jnp.allclose(out, ref, atol=2e-5, rtol=2e-5), "mismatch vs reference"

    print("KERNEL_OK")
</pallas_src>

<mosaic_0001>
module attributes {stable_mosaic.version = 11 : i64} {
  func.func @pointer_net_kernel(%arg0: i32, %arg1: memref<1x8x32xf32, #tpu.memory_space<vmem>>, %arg2: memref<1x16x32xf32, #tpu.memory_space<vmem>>, %arg3: memref<1x1x128xf32, #tpu.memory_space<vmem>>) attributes {dimension_semantics = [#tpu.dimension_semantics<parallel>], iteration_bounds = array<i64: 2>, scalar_prefetch = 0 : i64, scratch_operands = 0 : i64, tpu.core_type = #tpu.core_type<tc>, window_params = [{transform_indices = @transform_0, window_bounds = array<i64: 1, 8, 32>}, {transform_indices = @transform_1, window_bounds = array<i64: 1, 16, 32>}, {transform_indices = @transform_2, window_bounds = array<i64: 1, 1, 128>}]} {
    %c0 = arith.constant 0 : index
    %c0_0 = arith.constant 0 : index
    %c0_1 = arith.constant 0 : index
    %0 = vector.load %arg1[%c0, %c0_0, %c0_1] : memref<1x8x32xf32, #tpu.memory_space<vmem>>, vector<1x8x32xf32>
    %c0_2 = arith.constant 0 : index
    %c0_3 = arith.constant 0 : index
    %c0_4 = arith.constant 0 : index
    %1 = vector.load %arg2[%c0_2, %c0_3, %c0_4] : memref<1x16x32xf32, #tpu.memory_space<vmem>>, vector<1x16x32xf32>
    "tpu.trace_start"() <{level = 10 : i32, message = "bte,bse->bts"}> : () -> ()
    %cst = arith.constant dense<0.000000e+00> : vector<1x8x16xf32>
    %2 = tpu.matmul %0, %1, %cst {dimension_numbers = #tpu.dot_dimension_numbers<[2], [2], [1], [1], [0, 0, 0, 1, 1, 1], [0], [0]>} : vector<1x8x32xf32>, vector<1x16x32xf32>, vector<1x8x16xf32> -> vector<1x8x16xf32>
    "tpu.trace_stop"() : () -> ()
    %cst_5 = arith.constant dense<0xFF800000> : vector<1x8xf32>
    %3 = vector.multi_reduction <maximumf>, %2, %cst_5 [2] : vector<1x8x16xf32> to vector<1x8xf32>
    %4 = vector.shape_cast %3 : vector<1x8xf32> to vector<1x8x1xf32>
    %5 = vector.broadcast %4 : vector<1x8x1xf32> to vector<1x8x16xf32>
    %6 = arith.subf %2, %5 : vector<1x8x16xf32>
    %7 = math.exp %6 : vector<1x8x16xf32>
    %cst_6 = arith.constant dense<0.000000e+00> : vector<1x8xf32>
    %8 = vector.multi_reduction <add>, %7, %cst_6 [2] : vector<1x8x16xf32> to vector<1x8xf32>
    %9 = vector.shape_cast %8 : vector<1x8xf32> to vector<1x8x1xf32>
    %10 = vector.broadcast %9 : vector<1x8x1xf32> to vector<1x8x16xf32>
    %11 = arith.divf %7, %10 : vector<1x8x16xf32>
    %12 = vector.extract_strided_slice %11 {offsets = [0, 0, 0], sizes = [1, 1, 16], strides = [1, 1, 1]} : vector<1x8x16xf32> to vector<1x1x16xf32>
    %c0_7 = arith.constant 0 : index
    %c0_8 = arith.constant 0 : index
    %c0_9 = arith.constant 0 : index
    %13 = vector.load %arg3[%c0_7, %c0_8, %c0_9] : memref<1x1x128xf32, #tpu.memory_space<vmem>>, vector<1x1x16xf32>
    tpu.vector_store %arg3[%c0_7, %c0_8, %c0_9], %12 {strides = array<i32>} : memref<1x1x128xf32, #tpu.memory_space<vmem>>, vector<1x1x16xf32>,
    %14 = vector.extract_strided_slice %11 {offsets = [0, 1, 0], sizes = [1, 1, 16], strides = [1, 1, 1]} : vector<1x8x16xf32> to vector<1x1x16xf32>
    %c0_10 = arith.constant 0 : index
    %c0_11 = arith.constant 0 : index
    %c16 = arith.constant 16 : index
    %15 = vector.load %arg3[%c0_10, %c0_11, %c16] : memref<1x1x128xf32, #tpu.memory_space<vmem>>, vector<1x1x16xf32>
    tpu.vector_store %arg3[%c0_10, %c0_11, %c16], %14 {strides = array<i32>} : memref<1x1x128xf32, #tpu.memory_space<vmem>>, vector<1x1x16xf32>,
    %16 = vector.extract_strided_slice %11 {offsets = [0, 2, 0], sizes = [1, 1, 16], strides = [1, 1, 1]} : vector<1x8x16xf32> to vector<1x1x16xf32>
    %c0_12 = arith.constant 0 : index
    %c0_13 = arith.constant 0 : index
    %c32 = arith.constant 32 : index
    %17 = vector.load %arg3[%c0_12, %c0_13, %c32] : memref<1x1x128xf32, #tpu.memory_space<vmem>>, vector<1x1x16xf32>
    tpu.vector_store %arg3[%c0_12, %c0_13, %c32], %16 {strides = array<i32>} : memref<1x1x128xf32, #tpu.memory_space<vmem>>, vector<1x1x16xf32>,
    %18 = vector.extract_strided_slice %11 {offsets = [0, 3, 0], sizes = [1, 1, 16], strides = [1, 1, 1]} : vector<1x8x16xf32> to vector<1x1x16xf32>
    %c0_14 = arith.constant 0 : index
    %c0_15 = arith.constant 0 : index
    %c48 = arith.constant 48 : index
    %19 = vector.load %arg3[%c0_14, %c0_15, %c48] : memref<1x1x128xf32, #tpu.memory_space<vmem>>, vector<1x1x16xf32>
    tpu.vector_store %arg3[%c0_14, %c0_15, %c48], %18 {strides = array<i32>} : memref<1x1x128xf32, #tpu.memory_space<vmem>>, vector<1x1x16xf32>,
    %20 = vector.extract_strided_slice %11 {offsets = [0, 4, 0], sizes = [1, 1, 16], strides = [1, 1, 1]} : vector<1x8x16xf32> to vector<1x1x16xf32>
    %c0_16 = arith.constant 0 : index
    %c0_17 = arith.constant 0 : index
    %c64 = arith.constant 64 : index
    %21 = vector.load %arg3[%c0_16, %c0_17, %c64] : memref<1x1x128xf32, #tpu.memory_space<vmem>>, vector<1x1x16xf32>
    tpu.vector_store %arg3[%c0_16, %c0_17, %c64], %20 {strides = array<i32>} : memref<1x1x128xf32, #tpu.memory_space<vmem>>, vector<1x1x16xf32>,
    %22 = vector.extract_strided_slice %11 {offsets = [0, 5, 0], sizes = [1, 1, 16], strides = [1, 1, 1]} : vector<1x8x16xf32> to vector<1x1x16xf32>
    %c0_18 = arith.constant 0 : index
    %c0_19 = arith.constant 0 : index
    %c80 = arith.constant 80 : index
    %23 = vector.load %arg3[%c0_18, %c0_19, %c80] : memref<1x1x128xf32, #tpu.memory_space<vmem>>, vector<1x1x16xf32>
    tpu.vector_store %arg3[%c0_18, %c0_19, %c80], %22 {strides = array<i32>} : memref<1x1x128xf32, #tpu.memory_space<vmem>>, vector<1x1x16xf32>,
    %24 = vector.extract_strided_slice %11 {offsets = [0, 6, 0], sizes = [1, 1, 16], strides = [1, 1, 1]} : vector<1x8x16xf32> to vector<1x1x16xf32>
    %c0_20 = arith.constant 0 : index
    %c0_21 = arith.constant 0 : index
    %c96 = arith.constant 96 : index
    %25 = vector.load %arg3[%c0_20, %c0_21, %c96] : memref<1x1x128xf32, #tpu.memory_space<vmem>>, vector<1x1x16xf32>
    tpu.vector_store %arg3[%c0_20, %c0_21, %c96], %24 {strides = array<i32>} : memref<1x1x128xf32, #tpu.memory_space<vmem>>, vector<1x1x16xf32>,
    %26 = vector.extract_strided_slice %11 {offsets = [0, 7, 0], sizes = [1, 1, 16], strides = [1, 1, 1]} : vector<1x8x16xf32> to vector<1x1x16xf32>
    %c0_22 = arith.constant 0 : index
    %c0_23 = arith.constant 0 : index
    %c112 = arith.constant 112 : index
    %27 = vector.load %arg3[%c0_22, %c0_23, %c112] : memref<1x1x128xf32, #tpu.memory_space<vmem>>, vector<1x1x16xf32>
    tpu.vector_store %arg3[%c0_22, %c0_23, %c112], %26 {strides = array<i32>} : memref<1x1x128xf32, #tpu.memory_space<vmem>>, vector<1x1x16xf32>,
    return
  }
  func.func @transform_0(%arg0: i32) -> (i32, i32, i32) {
    %c0_i32 = arith.constant 0 : i32
    %c0_i32_0 = arith.constant 0 : i32
    %c0_i32_1 = arith.constant 0 : i32
    return %arg0, %c0_i32, %c0_i32_0 : i32, i32, i32
  }
  func.func @transform_1(%arg0: i32) -> (i32, i32, i32) {
    %c0_i32 = arith.constant 0 : i32
    %c0_i32_0 = arith.constant 0 : i32
    %c0_i32_1 = arith.constant 0 : i32
    return %arg0, %c0_i32, %c0_i32_0 : i32, i32, i32
  }
  func.func @transform_2(%arg0: i32) -> (i32, i32, i32) {
    %c0_i32 = arith.constant 0 : i32
    %c0_i32_0 = arith.constant 0 : i32
    %c0_i32_1 = arith.constant 0 : i32
    return %arg0, %c0_i32, %c0_i32_0 : i32, i32, i32
  }
}

</mosaic_0001>

<llo_original>
// kernel: tpu_custom_call.1
$region0: #{tpu_custom_call.1}
  #allocation0 [shape = 'u32[]', space=smem, size = 0x4, offset = 0x4, fixed_abs, tag = 'smem constant byte address 0x4 - core index']
  #allocation1 [shape = 'u32[144,128]{1,0:T(1,128)}', space=vmem, size = 0x12000, scoped, tag = 'internal scratch']
  %s0 = inlined_call_operand.hbm [shape: f32[2,8,32], index: 0, kind: input, shape index: {}]
  %s1 = inlined_call_operand.hbm [shape: f32[2,16,32], index: 1, kind: input, shape index: {}]
  %s2 = inlined_call_operand.hbm [shape: f32[2,1,128], index: 2, kind: output, shape index: {}]
  %s3 = sld [smem:[#allocation0]]
  $region49: #{tpu_custom_call.1} parent=0
    _
  %s5 = ssub.s32 1, %s3
  %s6 = scalar_select 0, %s5, %s3
  $region1: #{tpu_custom_call.1} parent=0
    #allocation2 [shape = 'u8[8192]{0}', space=vmem, size = 0x2000, scoped, tag = 'input window, operand 0']
    #allocation3 [shape = 's32[2]{0}', space=sflag, size = 0x8, scoped, tag = 'scoped memory for tpu_custom_call.1']
    #allocation4 [shape = 's32[2]{0}', space=sflag, size = 0x8, scoped, tag = 'scoped memory for tpu_custom_call.1']
    #allocation5 [shape = 'u8[16384]{0}', space=vmem, size = 0x4000, scoped, tag = 'input window, operand 1']
    #allocation6 [shape = 's32[2]{0}', space=sflag, size = 0x8, scoped, tag = 'scoped memory for tpu_custom_call.1']
    #allocation7 [shape = 'u8[1024]{0}', space=vmem, size = 0x400, scoped, tag = 'output window, operand 0']
    %7 = vsyncpa [#allocation3], 0
    %s8 = scalar_lea.sflag [#allocation3], 1
    %9 = vsyncpa %s8, 0
    %10 = vsyncpa [#allocation6], 0
    %s11 = scalar_lea.sflag [#allocation6], 1
    %12 = vsyncpa %s11, 0
    %13 = vsyncpa [#allocation4], 0
    %s14 = scalar_lea.sflag [#allocation4], 1
    %15 = vsyncpa %s14, 0
    loop: start=0, step=1, limit=4
    $region2: #{tpu_custom_call.1} parent=1 // loop_pre_header
      _
    $region3: #{tpu_custom_call.1} parent=1 // loop_header
      %s17 = sphi 0, %s21
      %p18 = scmp.ge.s32.totalorder %s17, 4
      %s27 = sphi 0, %s29
      %s30 = sphi 0, %s27
      %s31 = sphi 0, %s30
      %s47 = sphi 0, %s31
      %s53 = sphi 0, %s55
      %s56 = sphi 0, %s53
      %s57 = sphi 0, %s56
      %s73 = sphi 0, %s57
      %s79 = sphi 0, %s81
      %s82 = sphi 0, %s79
      %s83 = sphi 0, %s82
      %s99 = sphi 0, %s83
    $region4: #{tpu_custom_call.1} parent=1 // loop_header_branch
      %20 = sbr.rel (%p18) target = $region8
    $region5: #{tpu_custom_call.1} parent=1 // loop_body
      %s22 = ssub.s32 %s17, 1
      %s23 = ssub.s32 %s17, 2
      %s24 = sadd.s32 %s17, 1
      %s25 = ssub.s32 %s17, %s24
      %p26 = scmp.eq.s32.totalorder %s25, 0
      %s28 = sadd.s32 %s27, 1
      %s29 = scalar_select %p26, %s27, %s28
      %p32 = pneg %p26
      %p33 = scmp.eq.s32.totalorder %s17, 1
      %p34 = por %p32, %p33
      %p35 = scmp.ne.s32.totalorder %s27, %s30
      %p36 = scmp.eq.s32.totalorder %s17, 0
      %p37 = por %p35, %p36
      %p38 = scmp.ne.s32.totalorder %s27, %s30
      %p39 = scmp.eq.s32.totalorder %s22, 1
      %p40 = por %p38, %p39
      %p41 = scmp.ne.s32.totalorder %s30, %s31
      %p42 = scmp.eq.s32.totalorder %s22, 0
      %p43 = por %p41, %p42
      %p44 = scmp.ne.s32.totalorder %s30, %s31
      %p45 = scmp.eq.s32.totalorder %s23, 1
      %p46 = por %p44, %p45
      %p48 = scmp.ne.s32.totalorder %s31, %s47
      %p49 = scmp.eq.s32.totalorder %s23, 0
      %p50 = por %p48, %p49
      %s51 = ssub.s32 %s17, %s24
      %p52 = scmp.eq.s32.totalorder %s51, 0
      %s54 = sadd.s32 %s53, 1
      %s55 = scalar_select %p52, %s53, %s54
      %p58 = pneg %p52
      %p59 = scmp.eq.s32.totalorder %s17, 1
      %p60 = por %p58, %p59
      %p61 = scmp.ne.s32.totalorder %s53, %s56
      %p62 = scmp.eq.s32.totalorder %s17, 0
      %p63 = por %p61, %p62
      %p64 = scmp.ne.s32.totalorder %s53, %s56
      %p65 = scmp.eq.s32.totalorder %s22, 1
      %p66 = por %p64, %p65
      %p67 = scmp.ne.s32.totalorder %s56, %s57
      %p68 = scmp.eq.s32.totalorder %s22, 0
      %p69 = por %p67, %p68
      %p70 = scmp.ne.s32.totalorder %s56, %s57
      %p71 = scmp.eq.s32.totalorder %s23, 1
      %p72 = por %p70, %p71
      %p74 = scmp.ne.s32.totalorder %s57, %s73
      %p75 = scmp.eq.s32.totalorder %s23, 0
      %p76 = por %p74, %p75
      %s77 = ssub.s32 %s17, %s24
      %p78 = scmp.eq.s32.totalorder %s77, 0
      %s80 = sadd.s32 %s79, 1
      %s81 = scalar_select %p78, %s79, %s80
      %p84 = pneg %p78
      %p85 = scmp.eq.s32.totalorder %s17, 1
      %p86 = por %p84, %p85
      %p87 = scmp.ne.s32.totalorder %s79, %s82
      %p88 = scmp.eq.s32.totalorder %s17, 0
      %p89 = por %p87, %p88
      %p90 = scmp.ne.s32.totalorder %s79, %s82
      %p91 = scmp.eq.s32.totalorder %s22, 1
      %p92 = por %p90, %p91
      %p93 = scmp.ne.s32.totalorder %s82, %s83
      %p94 = scmp.eq.s32.totalorder %s22, 0
      %p95 = por %p93, %p94
      %p96 = scmp.ne.s32.totalorder %s82, %s83
      %p97 = scmp.eq.s32.totalorder %s23, 1
      %p98 = por %p96, %p97
      %p100 = scmp.ne.s32.totalorder %s83, %s99
      %p101 = scmp.eq.s32.totalorder %s23, 0
      %p102 = por %p100, %p101
      %p103 = scmp.le.s32.totalorder 1, %s17
      %p104 = scmp.lt.s32.totalorder %s17, 3
      %p105 = pnand %p103, %p104
      %p106 = pneg %p105
      // Predicated region
      $region9: #{tpu_custom_call.1} parent=5 // pred_check
        _
      $region10: #{tpu_custom_call.1} parent=5 // pred_check_branch
        %108 = sbr.rel (%p105) target = $region12
      $region11: #{tpu_custom_call.1} parent=5 // pred_region
        %s109 = ssub.s32 %s17, 1
      $region12: #{tpu_custom_call.1} parent=5 // pred_fallthru
        _
      %p110 = scmp.lt.s32.totalorder %s17, 2
      // Predicated region
      $region13: #{tpu_custom_call.1} parent=5 // pred_check
        %p111 = pneg %p110
      $region14: #{tpu_custom_call.1} parent=5 // pred_check_branch
        %113 = sbr.rel (%p111) target = $region16
      $region15: #{tpu_custom_call.1} parent=5 // pred_region
        // Predicated region
        $region17: #{tpu_custom_call.1} parent=15 // pred_check
          %p114 = pneg %p37
        $region18: #{tpu_custom_call.1} parent=15 // pred_check_branch
          %116 = sbr.rel (%p114) target = $region20
        $region19: #{tpu_custom_call.1} parent=15 // pred_region
          %s117 = sand.u32 %s27, 1
          %s118 = scalar_lea.sflag [#allocation3], %s117
          %s119 = sand.u32 %s27, 1
          %s120 = smul.addr %s119, 8
          %s121 = scalar_lea.vmem [#allocation2], %s120
          %s123 = ssub.s32 128, 128
          %124 = vsyncadd %s118, %s123
          %s125 = smul.addr %s17, 128
          %s126 = scalar_lea.hbm %s0, %s125
          %s128 = sshll.u32 %s121, 4
          %s129 = int_to_ptr.vmem [resolvable:$true] %s128
          %131 = dma.hbm_to_vmem [thread:$0]  %s126, 128, %s129, %s118
        $region20: #{tpu_custom_call.1} parent=15 // pred_fallthru
          _
        // Predicated region
        $region21: #{tpu_custom_call.1} parent=15 // pred_check
          %p132 = pneg %p63
        $region22: #{tpu_custom_call.1} parent=15 // pred_check_branch
          %134 = sbr.rel (%p132) target = $region24
        $region23: #{tpu_custom_call.1} parent=15 // pred_region
          %s135 = sand.u32 %s53, 1
          %s136 = scalar_lea.sflag [#allocation6], %s135
          %s137 = sand.u32 %s53, 1
          %s138 = smul.addr %s137, 16
          %s139 = scalar_lea.vmem [#allocation5], %s138
          %s141 = ssub.s32 256, 256
          %142 = vsyncadd %s136, %s141
          %s143 = smul.addr %s17, 2
          %s144 = smul.addr %s143, 128
          %s145 = scalar_lea.hbm %s1, %s144
          %s146 = sshll.u32 %s139, 4
          %s147 = int_to_ptr.vmem [resolvable:$true] %s146
          %152 = dma.hbm_to_vmem [thread:$0]  %s145, 256, %s147, %s136, 128, 128, 8
        $region24: #{tpu_custom_call.1} parent=15 // pred_fallthru
          _
      $region16: #{tpu_custom_call.1} parent=5 // pred_fallthru
        _
      %p153 = scmp.le.s32.totalorder 1, %s17
      %p154 = scmp.lt.s32.totalorder %s17, 3
      %p155 = pnand %p153, %p154
      %p156 = pneg %p155
      // Predicated region
      $region25: #{tpu_custom_call.1} parent=5 // pred_check
        _
      $region26: #{tpu_custom_call.1} parent=5 // pred_check_branch
        %158 = sbr.rel (%p155) target = $region28
      $region27: #{tpu_custom_call.1} parent=5 // pred_region
        %s159 = ssub.s32 %s17, 1
        %s160 = sand.u32 %s30, 1
        %s161 = scalar_lea.sflag [#allocation3], %s160
        %s162 = sand.u32 %s30, 1
        %s163 = smul.addr %s162, 8
        %s164 = scalar_lea.vmem [#allocation2], %s163
        // Predicated region
        $region29: #{tpu_custom_call.1} parent=27 // pred_check
          %p165 = pneg %p43
        $region30: #{tpu_custom_call.1} parent=27 // pred_check_branch
          %167 = sbr.rel (%p165) target = $region32
        $region31: #{tpu_custom_call.1} parent=27 // pred_region
          %168 = dma.done %s161, 128
        $region32: #{tpu_custom_call.1} parent=27 // pred_fallthru
          _
        %s169 = sand.u32 %s56, 1
        %s170 = scalar_lea.sflag [#allocation6], %s169
        %s171 = sand.u32 %s56, 1
        %s172 = smul.addr %s171, 16
        %s173 = scalar_lea.vmem [#allocation5], %s172
        // Predicated region
        $region33: #{tpu_custom_call.1} parent=27 // pred_check
          %p174 = pneg %p69
        $region34: #{tpu_custom_call.1} parent=27 // pred_check_branch
          %176 = sbr.rel (%p174) target = $region36
        $region35: #{tpu_custom_call.1} parent=27 // pred_region
          %177 = dma.done %s170, 256
        $region36: #{tpu_custom_call.1} parent=27 // pred_fallthru
          _
        %s178 = sand.u32 %s30, 1
        %s179 = scalar_lea.sflag [#allocation3], %s178
        %s180 = sand.u32 %s30, 1
        %s181 = smul.addr %s180, 8
        %s182 = scalar_lea.vmem [#allocation2], %s181
        %p183 = pneg %p43
        %p184 = pneg %p40
        %s185 = sand.u32 %s56, 1
        %s186 = scalar_lea.sflag [#allocation6], %s185
        %s187 = sand.u32 %s56, 1
        %s188 = smul.addr %s187, 16
        %s189 = scalar_lea.vmem [#allocation5], %s188
        %p190 = pneg %p69
        %p191 = pneg %p66
        %p192 = pneg %p95
        %p193 = pneg %p92
        %s194 = sand.u32 %s82, 1
        %s195 = scalar_lea.sflag [#allocation4], %s194
        %s196 = sand.u32 %s82, 1
        %s197 = scalar_lea.vmem [#allocation7], %s196
        %v198 = vld [vmem:[%s164] sm:$0xff]
        %v199 = vld [vmem:[%s173] sm:$0xff]
        %v200 = vld [vmem:[%s173 + $0x8] sm:$0xff]
        %vm201 = vcmask 261120
        %v203 = vsel %vm201, %v198, 0
        %v206 = vsel %vm201, %v199, 0
        %v209 = vsel %vm201, %v200, 0
        %211 = vmatprep.subr.mxu0 0.0
        %212 = vmatpush1.xpose.msra.mxu0 0.0
        %213 = vmatprep.subr.mxu0 0.0
        %214 = vmatpush1.xpose.msra.mxu0 0.0
        %215 = vmatprep.subr.mxu0 0.0
        %216 = vmatpush1.xpose.msra.mxu0 0.0
        %217 = vmatprep.subr.mxu0 0.0
        %218 = vmatpush1.xpose.msra.mxu0 0.0
        %219 = vmatprep.subr.mxu0 0.0
        %220 = vmatpush1.xpose.msra.mxu0 0.0
        %221 = vmatprep.subr.mxu0 0.0
        %222 = vmatpush1.xpose.msra.mxu0 0.0
        %223 = vmatprep.subr.mxu0 0.0
        %224 = vmatpush1.xpose.msra.mxu0 0.0
        %225 = vmatprep.subr.mxu0 0.0
        %226 = vmatpush1.xpose.msra.mxu0 0.0
        %227 = vmatprep.subr.mxu0 0.0
        %228 = vmatpush1.xpose.msra.mxu0 0.0
        %229 = vmatprep.subr.mxu0 0.0
        %230 = vmatpush1.xpose.msra.mxu0 0.0
        %231 = vmatprep.subr.mxu0 0.0
        %232 = vmatpush1.xpose.msra.mxu0 0.0
        %233 = vmatprep.subr.mxu0 0.0
        %234 = vmatpush1.xpose.msra.mxu0 0.0
        %235 = vmatprep.subr.mxu0 0.0
        %236 = vmatpush1.xpose.msra.mxu0 0.0
        %237 = vmatprep.subr.mxu0 0.0
        %238 = vmatpush1.xpose.msra.mxu0 0.0
        %239 = vmatprep.subr.mxu0 0.0
        %240 = vmatpush1.xpose.msra.mxu0 %v209
        %241 = vmatprep.subr.mxu0 0.0
        %242 = vmatpush1.xpose.msra.mxu0 %v206
        %243 = vmatprep.subr.mxu0 0.0
        %244 = vmatpush2.xpose.msra.mxu0 0.0
        %245 = vmatprep.subr.mxu0 0.0
        %246 = vmatpush2.xpose.msra.mxu0 0.0
        %247 = vmatprep.subr.mxu0 0.0
        %248 = vmatpush2.xpose.msra.mxu0 0.0
        %249 = vmatprep.subr.mxu0 0.0
        %250 = vmatpush2.xpose.msra.mxu0 0.0
        %251 = vmatprep.subr.mxu0 0.0
        %252 = vmatpush2.xpose.msra.mxu0 0.0
        %253 = vmatprep.subr.mxu0 0.0
        %254 = vmatpush2.xpose.msra.mxu0 0.0
        %255 = vmatprep.subr.mxu0 0.0
        %256 = vmatpush2.xpose.msra.mxu0 0.0
        %257 = vmatprep.subr.mxu0 0.0
        %258 = vmatpush2.xpose.msra.mxu0 0.0
        %259 = vmatprep.subr.mxu0 0.0
        %260 = vmatpush2.xpose.msra.mxu0 0.0
        %261 = vmatprep.subr.mxu0 0.0
        %262 = vmatpush2.xpose.msra.mxu0 0.0
        %263 = vmatprep.subr.mxu0 0.0
        %264 = vmatpush2.xpose.msra.mxu0 0.0
        %265 = vmatprep.subr.mxu0 0.0
        %266 = vmatpush2.xpose.msra.mxu0 0.0
        %267 = vmatprep.subr.mxu0 0.0
        %268 = vmatpush2.xpose.msra.mxu0 0.0
        %269 = vmatprep.subr.mxu0 0.0
        %270 = vmatpush2.xpose.msra.mxu0 0.0
        %271 = vmatprep.subr.mxu0 0.0
        %272 = vmatpush2.xpose.msra.mxu0 0.0
        %273 = vmatprep.subr.mxu0 0.0
        %274 = vmatpush2.xpose.msra.mxu0 0.0
        %275 = vmatprep.mubr.f32.mxu0 0.0
        %276 = vmatmul.mubr.f32.gmra.mxu0 %v203
        %v277 = vpop.f32.mrf.mxu0
        %v278 = vadd.f32 0.0, %v277
        %v279 = vpop.f32.mrf.mxu0
        %280 = vdwg.mxu0
        %vm281 = vcmask 130048
        %v282 = vsel %vm281, %v278, -inf
        %283 = vmax.xlane.f32.xlu0 %v282
        %v284 = vpop.xlane.xlu0 %283
        %v285 = vsub.f32 %v278, %v284
        %v286 = vmul.f32 %v285, 1.442695
        %v287 = vpow.pop %v286
        %v288 = vsel %vm281, %v287, 0.0
        %289 = vadd.xlane.f32.xlu0 %v288
        %v290 = vpop.xlane.xlu0 %289
        %v291 = vrcp.pop %v290
        %v292 = vmul.f32 %v287, %v291
        %vm293 = vcmask 122880
        %294 = vst.msk [vmem:[%s197] sm:$0x1] %vm293, %v292
        %296 = vrot.lane.b32.xlu0 %v292, 16
        %v297 = vpop.permute.xlu0 %296
        %vm299 = vcmask 255105
        %300 = vst.msk [vmem:[%s197 - $0x1] sm:$0x2] %vm299, %v297
        %301 = vrot.lane.b32.xlu0 %v292, 32
        %v302 = vpop.permute.xlu0 %301
        %vm304 = vcmask 387330
        %305 = vst.msk [vmem:[%s197 - $0x2] sm:$0x4] %vm304, %v302
        %306 = vrot.lane.b32.xlu0 %v292, 48
        %v307 = vpop.permute.xlu0 %306
        %vm309 = vcmask 519555
        %310 = vst.msk [vmem:[%s197 - $0x3] sm:$0x8] %vm309, %v307
        %311 = vrot.lane.b32.xlu0 %v292, 64
        %v312 = vpop.permute.xlu0 %311
        %vm314 = vcmask 651780
        %315 = vst.msk [vmem:[%s197 - $0x4] sm:$0x10] %vm314, %v312
        %316 = vrot.lane.b32.xlu0 %v292, 80
        %v317 = vpop.permute.xlu0 %316
        %vm319 = vcmask 784005
        %320 = vst.msk [vmem:[%s197 - $0x5] sm:$0x20] %vm319, %v317
        %321 = vrot.lane.b32.xlu0 %v292, 96
        %v322 = vpop.permute.xlu0 %321
        %vm324 = vcmask 916230
        %325 = vst.msk [vmem:[%s197 - $0x6] sm:$0x40] %vm324, %v322
        %326 = vrot.lane.b32.xlu0 %v292, 112
        %v327 = vpop.permute.xlu0 %326
        %vm329 = vcmask 1048455
        %330 = vst.msk [vmem:[%s197 - $0x7] sm:$0x80] %vm329, %v327
        %s331 = sand.u32 %s82, 1
        %s332 = scalar_lea.sflag [#allocation4], %s331
        %s333 = sand.u32 %s82, 1
        %s334 = scalar_lea.vmem [#allocation7], %s333
        // Predicated region
        $region37: #{tpu_custom_call.1} parent=27 // pred_check
          %p335 = pneg %p92
        $region38: #{tpu_custom_call.1} parent=27 // pred_check_branch
          %337 = sbr.rel (%p335) target = $region40
        $region39: #{tpu_custom_call.1} parent=27 // pred_region
          %s339 = ssub.s32 16, 16
          %340 = vsyncadd %s332, %s339
          %s341 = smul.addr %s22, 16
          %s342 = scalar_lea.hbm %s2, %s341
          %s344 = sshll.u32 %s334, 4
          %s345 = int_to_ptr.vmem [resolvable:$true] %s344
          %347 = dma.vmem_to_hbm [thread:$0]  %s345, 16, %s342, %s332
        $region40: #{tpu_custom_call.1} parent=27 // pred_fallthru
          _
      $region28: #{tpu_custom_call.1} parent=5 // pred_fallthru
        _
      %p348 = scmp.le.s32.totalorder 2, %s17
      // Predicated region
      $region41: #{tpu_custom_call.1} parent=5 // pred_check
        %p349 = pneg %p348
      $region42: #{tpu_custom_call.1} parent=5 // pred_check_branch
        %351 = sbr.rel (%p349) target = $region44
      $region43: #{tpu_custom_call.1} parent=5 // pred_region
        %s352 = ssub.s32 %s17, 2
        // Predicated region
        $region45: #{tpu_custom_call.1} parent=43 // pred_check
          %p353 = pneg %p98
        $region46: #{tpu_custom_call.1} parent=43 // pred_check_branch
          %355 = sbr.rel (%p353) target = $region48
        $region47: #{tpu_custom_call.1} parent=43 // pred_region
          %s356 = sand.u32 %s83, 1
          %s357 = scalar_lea.sflag [#allocation4], %s356
          %s358 = sand.u32 %s83, 1
          %s359 = scalar_lea.vmem [#allocation7], %s358
          %360 = dma.done %s357, 16
        $region48: #{tpu_custom_call.1} parent=43 // pred_fallthru
          _
      $region44: #{tpu_custom_call.1} parent=5 // pred_fallthru
        _
    $region6: #{tpu_custom_call.1} parent=1 // loop_footer
      %s21 = sadd.s32 1, %s17
    $region7: #{tpu_custom_call.1} parent=1 // loop_footer_branch
      %16 = sbr.rel target = $region3
    $region8: #{tpu_custom_call.1} parent=1 // loop_exit
      _
    %361 = vsyncpa [#allocation3], 1
    %s362 = scalar_lea.sflag [#allocation3], 1
    %363 = vsyncpa %s362, 1
    %364 = vsyncpa [#allocation6], 1
    %s365 = scalar_lea.sflag [#allocation6], 1
    %366 = vsyncpa %s365, 1
    %367 = vsyncpa [#allocation4], 1
    %s368 = scalar_lea.sflag [#allocation4], 1
    %369 = vsyncpa %s368, 1

</llo_original>
